<compile_context>
chip_gen: v6e
topology: v6e:2x2x1
jax: 0.10.0
libtpu: 0.0.40
codegen_flags: <defaults>
</compile_context>

<pallas_src>
import jax
import jax.numpy as jnp
from jax.experimental import pallas as pl
from jax.experimental.pallas import tpu as pltpu


def _round_up(x, m):
    return ((x + m - 1) // m) * m


def _cdiv(a, b):
    return (a + b - 1) // b


def _vmem_capacity_bytes():
    """Physical VMEM per TensorCore for this generation (conservative fallback)."""
    try:
        cap = getattr(pltpu.get_tpu_info(), "vmem_capacity_bytes", None)
        if cap:
            return int(cap)
    except Exception:
        pass
    return 64 * 1024 * 1024  # v7x per-TC size; v5e/v6e have more (128 MiB)


# ---------------------------------------------------------------------------
# Kernels
# ---------------------------------------------------------------------------

def ffn_resident_kernel(x_ref, w1_ref, b1_ref, w2_ref, b2_ref, o_ref):
    """Weights fully resident in VMEM; single pass per token tile."""
    h = jnp.dot(x_ref[...], w1_ref[...], preferred_element_type=jnp.float32)
    h = jnp.maximum(h + b1_ref[...].astype(jnp.float32), 0.0)
    o = jnp.dot(h.astype(w2_ref.dtype), w2_ref[...],
                preferred_element_type=jnp.float32)
    o_ref[...] = o + b2_ref[...].astype(jnp.float32)
    # Dropout(p=0) == identity -> nothing to do.


def ffn_stream_kernel(x_ref, w1_ref, b1_ref, w2_ref, b2_ref, o_ref):
    """Hidden axis streamed in TH chunks; the f32 o_ref tile (block index
    constant across k) is itself the resident accumulator."""
    k = pl.program_id(1)

    @pl.when(k == 0)
    def _():
        o_ref[...] = jnp.zeros_like(o_ref)

    # ReLU factors exactly per hidden chunk, so chunked accumulation is exact.
    h = jnp.dot(x_ref[...], w1_ref[...], preferred_element_type=jnp.float32)
    h = jnp.maximum(h + b1_ref[...].astype(jnp.float32), 0.0)
    o_ref[...] += jnp.dot(h.astype(w2_ref.dtype), w2_ref[...],
                          preferred_element_type=jnp.float32)

    @pl.when(k == pl.num_programs(1) - 1)
    def _():
        o_ref[...] += b2_ref[...].astype(jnp.float32)


# ---------------------------------------------------------------------------
# Tile planning (generation-aware)
# ---------------------------------------------------------------------------

def _stream_footprint(tm, cp, th, itemsize):
    return (2 * (cp * th + th * cp + th) * itemsize   # double-buffered w1/w2/b1 (k-varying)
            + 2 * tm * cp * itemsize                  # x tile (varies with i)
            + 2 * tm * cp * 4                         # f32 output/accumulator tile
            + 2 * cp * itemsize                       # resident b2
            + tm * th * 4)                            # f32 hidden intermediate


def _resident_footprint(tm, cp, hp, itemsize):
    w_bytes = (2 * cp * hp + hp + cp) * itemsize
    return (2 * w_bytes                 # conservative: weight buffers counted twice
            + 2 * tm * cp * itemsize    # x tiles
            + 2 * tm * cp * 4           # f32 out tiles
            + tm * hp * 4)              # f32 hidden intermediate


def _weight_plan(C, H, itemsize, *, th_cap=2048, force_stream=False):
    """Choose the hidden-axis tiling (and resident vs. streaming) from the weights."""
    vmem_cap = _vmem_capacity_bytes()
    budget = int(0.80 * vmem_cap)
    Cp = _round_up(C, 128)
    Hp_full = _round_up(H, 128)

    # Weight-resident fast path: all weights + biases in <= ~45% of VMEM.
    w_bytes = (2 * Cp * Hp_full + Hp_full + Cp) * itemsize
    if not force_stream and w_bytes <= int(0.45 * vmem_cap):
        return dict(Cp=Cp, Hp=Hp_full, TH=Hp_full, resident=True, vmem_cap=vmem_cap)

    # Streaming path: shrink TH until the double-buffered footprint fits
    # (budgeted with a reference TM=512; per-call TM may only shrink further).
    th = 128
    for cand in (2048, 1024, 512, 256, 128):
        if cand > th_cap or cand > Hp_full:
            continue
        if _stream_footprint(512, Cp, cand, itemsize) <= budget:
            th = cand
            break
    return dict(Cp=Cp, Hp=_round_up(H, th), TH=th, resident=False, vmem_cap=vmem_cap)


def _token_tile(M, plan, itemsize, *, tm_cap=1024):
    budget = int(0.80 * plan["vmem_cap"])
    Cp, Hp, TH = plan["Cp"], plan["Hp"], plan["TH"]

    n = max(1, _cdiv(M, tm_cap))
    if n == 1 and M >= 256:
        n = 2                      # keep both v7x TensorCores busy via "parallel" axis
    tm = max(16, _round_up(_cdiv(M, n), 16))

    def foot(t):
        if plan["resident"]:
            return _resident_footprint(t, Cp, Hp, itemsize)
        return _stream_footprint(t, Cp, TH, itemsize)

    while tm > 16 and foot(tm) > budget:
        tm = max(16, _round_up(tm // 2, 16))
    return tm


# ---------------------------------------------------------------------------
# Wrappers
# ---------------------------------------------------------------------------

def prepare_params(w1, b1, w2, b2, *, compute_dtype=jnp.bfloat16,
                   th_cap=2048, force_stream=False):
    """Cast + pad the weights once, outside the per-call hot path."""
    b1 = b1.reshape(1, -1)
    b2 = b2.reshape(1, -1)
    C, H = w1.shape
    cdt = jnp.dtype(compute_dtype)
    plan = _weight_plan(C, H, cdt.itemsize, th_cap=th_cap, force_stream=force_stream)
    Cp, Hp = plan["Cp"], plan["Hp"]
    w1p = jnp.pad(w1.astype(cdt), ((0, Cp - C), (0, Hp - H)))
    b1p = jnp.pad(b1.astype(cdt), ((0, 0), (0, Hp - H)))
    w2p = jnp.pad(w2.astype(cdt), ((0, Hp - H), (0, Cp - C)))
    b2p = jnp.pad(b2.astype(cdt), ((0, 0), (0, Cp - C)))
    return dict(w1=w1p, b1=b1p, w2=w2p, b2=b2p, C=C, H=H,
                compute_dtype=cdt, plan=plan)


def feedforward_prepared(x, params, *, tm_cap=1024):
    """x: [B, T, C] -> [B, T, C] using pre-padded/cast params."""
    B, T, C = x.shape
    assert C == params["C"], "channel mismatch vs. prepared params"
    plan = params["plan"]
    Cp, Hp, TH = plan["Cp"], plan["Hp"], plan["TH"]
    cdt = params["compute_dtype"]
    itemsize = cdt.itemsize
    out_dtype = x.dtype
    M = B * T

    TM = _token_tile(M, plan, itemsize, tm_cap=tm_cap)
    Mp = _round_up(M, TM)
    x2d = jnp.pad(x.reshape(M, C).astype(cdt), ((0, Mp - M), (0, Cp - C)))
    n_m_tiles = Mp // TM

    if plan["resident"]:
        foot = _resident_footprint(TM, Cp, Hp, itemsize)
        grid = (n_m_tiles,)
        kernel = ffn_resident_kernel
        in_specs = [
            pl.BlockSpec((TM, Cp), lambda i: (i, 0)),   # x: per-token tile
            pl.BlockSpec((Cp, Hp), lambda i: (0, 0)),   # w1: resident
            pl.BlockSpec((1, Hp), lambda i: (0, 0)),    # b1: resident
            pl.BlockSpec((Hp, Cp), lambda i: (0, 0)),   # w2: resident
            pl.BlockSpec((1, Cp), lambda i: (0, 0)),    # b2: resident
        ]
        out_specs = pl.BlockSpec((TM, Cp), lambda i: (i, 0))
        semantics = ("parallel",)
        weight_passes = 1
    else:
        foot = _stream_footprint(TM, Cp, TH, itemsize)
        grid = (n_m_tiles, Hp // TH)
        kernel = ffn_stream_kernel
        in_specs = [
            pl.BlockSpec((TM, Cp), lambda i, k: (i, 0)),   # x: per-token tile
            pl.BlockSpec((Cp, TH), lambda i, k: (0, k)),   # w1: H-chunk per k
            pl.BlockSpec((1, TH), lambda i, k: (0, k)),    # b1: H-chunk per k
            pl.BlockSpec((TH, Cp), lambda i, k: (k, 0)),   # w2: H-chunk per k
            pl.BlockSpec((1, Cp), lambda i, k: (0, 0)),    # b2: resident
        ]
        out_specs = pl.BlockSpec((TM, Cp), lambda i, k: (i, 0))
        semantics = ("parallel", "arbitrary")
        weight_passes = n_m_tiles  # weights re-streamed once per token tile

    vmem_limit = int(min(0.90 * plan["vmem_cap"], max(4 << 20, 1.15 * foot)))

    w_bytes = int((params["w1"].size + params["w2"].size
                   + params["b1"].size + params["b2"].size) * itemsize)
    cost = pl.CostEstimate(
        flops=int(4 * Mp * Cp * Hp),                       # two matmuls
        transcendentals=0,
        bytes_accessed=int(x2d.size * itemsize
                           + w_bytes * weight_passes       # account for re-streaming
                           + Mp * Cp * 4),                 # f32 output write
    )

    out2d = pl.pallas_call(
        kernel,
        out_shape=jax.ShapeDtypeStruct((Mp, Cp), jnp.float32),
        grid_spec=pltpu.PrefetchScalarGridSpec(
            num_scalar_prefetch=0,
            grid=grid,
            in_specs=in_specs,
            out_specs=out_specs,
        ),
        compiler_params=pltpu.CompilerParams(
            dimension_semantics=semantics,
            vmem_limit_bytes=vmem_limit,
        ),
        cost_estimate=cost,
    )(x2d, params["w1"], params["b1"], params["w2"], params["b2"])

    return out2d[:M, :C].reshape(B, T, C).astype(out_dtype)


def feedforward(x, w1, b1, w2, b2, *, compute_dtype=jnp.bfloat16,
                tm_cap=1024, th_cap=2048, force_stream=False):
    """Convenience wrapper: prepare weights and run (prefer prepare_params once
    + feedforward_prepared in real use, so weights aren't re-cast per call)."""
    params = prepare_params(w1, b1, w2, b2, compute_dtype=compute_dtype,
                            th_cap=th_cap, force_stream=force_stream)
    return feedforward_prepared(x, params, tm_cap=tm_cap)


def init_params(key, n_embd):
    """Deterministic init mirroring nn.Linear defaults (U[-1/sqrt(fan_in), +])."""
    hidden = 4 * n_embd
    k1, k2, k3, k4 = jax.random.split(key, 4)
    bound1 = 1.0 / (n_embd ** 0.5)
    bound2 = 1.0 / (hidden ** 0.5)
    # Stored already transposed for x @ W convention (PyTorch stores [out, in]).
    w1 = jax.random.uniform(k1, (n_embd, hidden), jnp.float32, -bound1, bound1)
    b1 = jax.random.uniform(k2, (1, hidden), jnp.float32, -bound1, bound1)
    w2 = jax.random.uniform(k3, (hidden, n_embd), jnp.float32, -bound2, bound2)
    b2 = jax.random.uniform(k4, (1, n_embd), jnp.float32, -bound2, bound2)
    return w1, b1, w2, b2


if __name__ == "__main__":
    n_embd = 8           # GPTConfig.n_embd
    block_size = 16      # GPTConfig.block_size
    batch = 2

    key = jax.random.PRNGKey(0)
    kx, kp = jax.random.split(key)
    x = jax.random.normal(kx, (batch, block_size, n_embd), jnp.float32)
    w1, b1, w2, b2 = init_params(kp, n_embd)

    # Reference (same math as the PyTorch module; Dropout(p=0) == identity).
    ref = (jnp.maximum(x.reshape(-1, n_embd) @ w1 + b1, 0.0) @ w2 + b2)
    ref = ref.reshape(batch, block_size, n_embd)

    # 1) f32 compute path: tight correctness check.
    out_f32 = jax.block_until_ready(
        feedforward(x, w1, b1, w2, b2, compute_dtype=jnp.float32))
    assert out_f32.shape == (batch, block_size, n_embd)
    assert jnp.allclose(out_f32, ref, atol=1e-5, rtol=1e-5)

    # 2) Default bf16 compute path (f32 accumulation), weights prepared once.
    params = prepare_params(w1, b1, w2, b2)
    out_bf16 = jax.block_until_ready(feedforward_prepared(x, params))
    assert out_bf16.shape == (batch, block_size, n_embd)
    assert out_bf16.dtype == x.dtype
    assert jnp.allclose(out_bf16, ref, atol=3e-2, rtol=3e-2)

    # 3) Exercise the streaming (hidden-chunked) path on a larger synthetic FFN.
    C2, H2 = 128, 512
    ks = jax.random.split(jax.random.PRNGKey(0), 5)
    x2 = jax.random.normal(ks[0], (2, 32, C2), jnp.float32)
    w1b = jax.random.uniform(ks[1], (C2, H2), jnp.float32, -0.05, 0.05)
    b1b = jax.random.uniform(ks[2], (1, H2), jnp.float32, -0.05, 0.05)
    w2b = jax.random.uniform(ks[3], (H2, C2), jnp.float32, -0.05, 0.05)
    b2b = jax.random.uniform(ks[4], (1, C2), jnp.float32, -0.05, 0.05)
    out2 = jax.block_until_ready(
        feedforward(x2, w1b, b1b, w2b, b2b, compute_dtype=jnp.float32,
                    th_cap=128, force_stream=True))
    ref2 = (jnp.maximum(x2.reshape(-1, C2) @ w1b + b1b, 0.0) @ w2b + b2b)
    ref2 = ref2.reshape(x2.shape)
    assert jnp.allclose(out2, ref2, atol=1e-3, rtol=1e-3)

    print("KERNEL_OK")
</pallas_src>

<mosaic_0001>
module attributes {stable_mosaic.version = 11 : i64} {
  func.func @ffn_resident_kernel(%arg0: i32, %arg1: memref<32x128xf32, #tpu.memory_space<vmem>>, %arg2: memref<128x128xf32, #tpu.memory_space<vmem>>, %arg3: memref<1x128xf32, #tpu.memory_space<vmem>>, %arg4: memref<128x128xf32, #tpu.memory_space<vmem>>, %arg5: memref<1x128xf32, #tpu.memory_space<vmem>>, %arg6: memref<32x128xf32, #tpu.memory_space<vmem>>) attributes {dimension_semantics = [#tpu.dimension_semantics<parallel>], iteration_bounds = array<i64: 1>, scalar_prefetch = 0 : i64, scratch_operands = 0 : i64, tpu.core_type = #tpu.core_type<tc>, window_params = [{transform_indices = @transform_0, window_bounds = array<i64: 32, 128>}, {pipeline_mode = #tpu.pipeline_mode<synchronous>, transform_indices = @transform_1, window_bounds = array<i64: 128, 128>}, {pipeline_mode = #tpu.pipeline_mode<synchronous>, transform_indices = @transform_2, window_bounds = array<i64: 1, 128>}, {pipeline_mode = #tpu.pipeline_mode<synchronous>, transform_indices = @transform_3, window_bounds = array<i64: 128, 128>}, {pipeline_mode = #tpu.pipeline_mode<synchronous>, transform_indices = @transform_4, window_bounds = array<i64: 1, 128>}, {transform_indices = @transform_5, window_bounds = array<i64: 32, 128>}]} {
    %c0 = arith.constant 0 : index
    %c0_0 = arith.constant 0 : index
    %0 = vector.load %arg1[%c0, %c0_0] : memref<32x128xf32, #tpu.memory_space<vmem>>, vector<32x128xf32>
    %c0_1 = arith.constant 0 : index
    %c0_2 = arith.constant 0 : index
    %1 = vector.load %arg2[%c0_1, %c0_2] : memref<128x128xf32, #tpu.memory_space<vmem>>, vector<128x128xf32>
    %cst = arith.constant dense<0.000000e+00> : vector<32x128xf32>
    %2 = tpu.matmul %0, %1, %cst {dimension_numbers = #tpu.dot_dimension_numbers<[1], [0], [0], [1], [0, 0, 1, 1], [], []>} : vector<32x128xf32>, vector<128x128xf32>, vector<32x128xf32> -> vector<32x128xf32>
    %c0_3 = arith.constant 0 : index
    %c0_4 = arith.constant 0 : index
    %3 = vector.load %arg3[%c0_3, %c0_4] : memref<1x128xf32, #tpu.memory_space<vmem>>, vector<1x128xf32>
    %4 = vector.broadcast %3 : vector<1x128xf32> to vector<32x128xf32>
    %5 = arith.addf %2, %4 : vector<32x128xf32>
    %cst_5 = arith.constant 0.000000e+00 : f32
    %6 = vector.broadcast %cst_5 : f32 to vector<32x128xf32>
    %7 = arith.maximumf %5, %6 : vector<32x128xf32>
    %c0_6 = arith.constant 0 : index
    %c0_7 = arith.constant 0 : index
    %8 = vector.load %arg4[%c0_6, %c0_7] : memref<128x128xf32, #tpu.memory_space<vmem>>, vector<128x128xf32>
    %cst_8 = arith.constant dense<0.000000e+00> : vector<32x128xf32>
    %9 = tpu.matmul %7, %8, %cst_8 {dimension_numbers = #tpu.dot_dimension_numbers<[1], [0], [0], [1], [0, 0, 1, 1], [], []>} : vector<32x128xf32>, vector<128x128xf32>, vector<32x128xf32> -> vector<32x128xf32>
    %c0_9 = arith.constant 0 : index
    %c0_10 = arith.constant 0 : index
    %10 = vector.load %arg5[%c0_9, %c0_10] : memref<1x128xf32, #tpu.memory_space<vmem>>, vector<1x128xf32>
    %11 = vector.broadcast %10 : vector<1x128xf32> to vector<32x128xf32>
    %12 = arith.addf %9, %11 : vector<32x128xf32>
    %c0_11 = arith.constant 0 : index
    %c0_12 = arith.constant 0 : index
    %13 = vector.load %arg6[%c0_11, %c0_12] : memref<32x128xf32, #tpu.memory_space<vmem>>, vector<32x128xf32>
    tpu.vector_store %arg6[%c0_11, %c0_12], %12 {strides = array<i32>} : memref<32x128xf32, #tpu.memory_space<vmem>>, vector<32x128xf32>,
    return
  }
  func.func @transform_0(%arg0: i32) -> (i32, i32) {
    %c0_i32 = arith.constant 0 : i32
    %c0_i32_0 = arith.constant 0 : i32
    return %arg0, %c0_i32 : i32, i32
  }
  func.func @transform_1(%arg0: i32) -> (i32, i32) {
    %c0_i32 = arith.constant 0 : i32
    %c0_i32_0 = arith.constant 0 : i32
    %c0_i32_1 = arith.constant 0 : i32
    return %c0_i32, %c0_i32_0 : i32, i32
  }
  func.func @transform_2(%arg0: i32) -> (i32, i32) {
    %c0_i32 = arith.constant 0 : i32
    %c0_i32_0 = arith.constant 0 : i32
    %c0_i32_1 = arith.constant 0 : i32
    return %c0_i32, %c0_i32_0 : i32, i32
  }
  func.func @transform_3(%arg0: i32) -> (i32, i32) {
    %c0_i32 = arith.constant 0 : i32
    %c0_i32_0 = arith.constant 0 : i32
    %c0_i32_1 = arith.constant 0 : i32
    return %c0_i32, %c0_i32_0 : i32, i32
  }
  func.func @transform_4(%arg0: i32) -> (i32, i32) {
    %c0_i32 = arith.constant 0 : i32
    %c0_i32_0 = arith.constant 0 : i32
    %c0_i32_1 = arith.constant 0 : i32
    return %c0_i32, %c0_i32_0 : i32, i32
  }
  func.func @transform_5(%arg0: i32) -> (i32, i32) {
    %c0_i32 = arith.constant 0 : i32
    %c0_i32_0 = arith.constant 0 : i32
    return %arg0, %c0_i32 : i32, i32
  }
}

</mosaic_0001>

<llo_original>
// kernel: tpu_custom_call.1
$region0: #{tpu_custom_call.1}
  #allocation0 [shape = 'u32[]', space=smem, size = 0x4, offset = 0x4, fixed_abs, tag = 'smem constant byte address 0x4 - core index']
  #allocation1 [shape = 'u32[144,128]{1,0:T(1,128)}', space=vmem, size = 0x12000, scoped, tag = 'internal scratch']
  %s0 = inlined_call_operand.hbm [shape: f32[32,128], index: 0, kind: input, shape index: {}]
  %s1 = inlined_call_operand.hbm [shape: f32[128,128], index: 1, kind: input, shape index: {}]
  %s2 = inlined_call_operand.vmem [shape: f32[1,128], index: 2, kind: input, shape index: {}]
  %s3 = inlined_call_operand.hbm [shape: f32[128,128], index: 3, kind: input, shape index: {}]
  %s4 = inlined_call_operand.vmem [shape: f32[1,128], index: 4, kind: input, shape index: {}]
  %s5 = inlined_call_operand.hbm [shape: f32[32,128], index: 5, kind: output, shape index: {}]
  %s6 = sld [smem:[#allocation0]]
  $region42: #{tpu_custom_call.1} parent=0
    _
  %s8 = ssub.s32 1, %s6
  %s9 = scalar_select 0, %s8, %s6
  $region1: #{tpu_custom_call.1} parent=0
    #allocation2 [shape = 'u8[16384]{0}', space=vmem, size = 0x4000, scoped, tag = 'input window, operand 0, single buffered']
    #allocation3 [shape = 's32[1]{0}', space=sflag, size = 0x4, scoped, tag = 'scoped memory for tpu_custom_call.1']
    #allocation4 [shape = 's32[1]{0}', space=sflag, size = 0x4, scoped, tag = 'scoped memory for tpu_custom_call.1']
    #allocation5 [shape = 'u8[65536]{0}', space=vmem, size = 0x10000, scoped, tag = 'input window, operand 1, single buffered']
    #allocation6 [shape = 's32[1]{0}', space=sflag, size = 0x4, scoped, tag = 'scoped memory for tpu_custom_call.1']
    #allocation7 [shape = 'u8[65536]{0}', space=vmem, size = 0x10000, scoped, tag = 'input window, operand 3, single buffered']
    #allocation8 [shape = 'u8[16384]{0}', space=vmem, size = 0x4000, scoped, tag = 'output window, operand 0, single buffered']
    %10 = vsyncpa [#allocation3], 0
    %11 = vsyncpa [#allocation6], 0
    %12 = vsyncpa [#allocation4], 0
    // Predicated region
    $region2: #{tpu_custom_call.1} parent=1 // pred_check
      _
    $region3: #{tpu_custom_call.1} parent=1 // pred_check_branch
      %14 = sbr.rel (0) target = $region5
    $region4: #{tpu_custom_call.1} parent=1 // pred_region
      %s16 = ssub.s32 512, 512
      %17 = vsyncadd [#allocation3], %s16
      %s18 = sshll.u32 [#allocation2], 4
      %s19 = int_to_ptr.vmem [resolvable:$true] %s18
      %24 = dma.hbm_to_vmem [thread:$0]  %s0, 512, %s19, [#allocation3], 128, 128, 8
    $region5: #{tpu_custom_call.1} parent=1 // pred_fallthru
      _
    // Predicated region
    $region6: #{tpu_custom_call.1} parent=1 // pred_check
      _
    $region7: #{tpu_custom_call.1} parent=1 // pred_check_branch
      %26 = sbr.rel (0) target = $region9
    $region8: #{tpu_custom_call.1} parent=1 // pred_region
      %s28 = ssub.s32 2048, 2048
      %29 = vsyncadd [#allocation6], %s28
      %s30 = sshll.u32 [#allocation5], 4
      %s31 = int_to_ptr.vmem [resolvable:$true] %s30
      %36 = dma.hbm_to_vmem [thread:$0]  %s1, 2048, %s31, [#allocation6], 128, 128, 8
    $region9: #{tpu_custom_call.1} parent=1 // pred_fallthru
      _
    // Predicated region
    $region10: #{tpu_custom_call.1} parent=1 // pred_check
      _
    $region11: #{tpu_custom_call.1} parent=1 // pred_check_branch
      %38 = sbr.rel (0) target = $region13
    $region12: #{tpu_custom_call.1} parent=1 // pred_region
      _
    $region13: #{tpu_custom_call.1} parent=1 // pred_fallthru
      _
    // Predicated region
    $region14: #{tpu_custom_call.1} parent=1 // pred_check
      _
    $region15: #{tpu_custom_call.1} parent=1 // pred_check_branch
      %40 = sbr.rel (0) target = $region17
    $region16: #{tpu_custom_call.1} parent=1 // pred_region
      %s42 = ssub.s32 2048, 2048
      %43 = vsyncadd [#allocation6], %s42
      %s44 = sshll.u32 [#allocation7], 4
      %s45 = int_to_ptr.vmem [resolvable:$true] %s44
      %50 = dma.hbm_to_vmem [thread:$0]  %s3, 2048, %s45, [#allocation6], 128, 128, 8
    $region17: #{tpu_custom_call.1} parent=1 // pred_fallthru
      _
    // Predicated region
    $region18: #{tpu_custom_call.1} parent=1 // pred_check
      _
    $region19: #{tpu_custom_call.1} parent=1 // pred_check_branch
      %52 = sbr.rel (0) target = $region21
    $region20: #{tpu_custom_call.1} parent=1 // pred_region
      _
    $region21: #{tpu_custom_call.1} parent=1 // pred_fallthru
      _
    // Predicated region
    $region22: #{tpu_custom_call.1} parent=1 // pred_check
      _
    $region23: #{tpu_custom_call.1} parent=1 // pred_check_branch
      %54 = sbr.rel (0) target = $region25
    $region24: #{tpu_custom_call.1} parent=1 // pred_region
      %55 = dma.done [#allocation3], 512
    $region25: #{tpu_custom_call.1} parent=1 // pred_fallthru
      _
    // Predicated region
    $region26: #{tpu_custom_call.1} parent=1 // pred_check
      _
    $region27: #{tpu_custom_call.1} parent=1 // pred_check_branch
      %57 = sbr.rel (0) target = $region29
    $region28: #{tpu_custom_call.1} parent=1 // pred_region
      %58 = dma.done [#allocation6], 2048
    $region29: #{tpu_custom_call.1} parent=1 // pred_fallthru
      _
    // Predicated region
    $region30: #{tpu_custom_call.1} parent=1 // pred_check
      _
    $region31: #{tpu_custom_call.1} parent=1 // pred_check_branch
      %60 = sbr.rel (0) target = $region33
    $region32: #{tpu_custom_call.1} parent=1 // pred_region
      %61 = dma.done [#allocation6], 2048
    $region33: #{tpu_custom_call.1} parent=1 // pred_fallthru
      _
    %v62 = vld [vmem:[#allocation2] sm:$0xff]
    %v63 = vld [vmem:[#allocation2 + $0x8] sm:$0xff]
    %v64 = vld [vmem:[#allocation2 + $0x10] sm:$0xff]
    %v65 = vld [vmem:[#allocation2 + $0x18] sm:$0xff]
    %v66 = vld [vmem:[#allocation5] sm:$0xff]
    %v67 = vld [vmem:[#allocation5 + $0x8] sm:$0xff]
    %v68 = vld [vmem:[#allocation5 + $0x10] sm:$0xff]
    %v69 = vld [vmem:[#allocation5 + $0x18] sm:$0xff]
    %v70 = vld [vmem:[#allocation5 + $0x20] sm:$0xff]
    %v71 = vld [vmem:[#allocation5 + $0x28] sm:$0xff]
    %v72 = vld [vmem:[#allocation5 + $0x30] sm:$0xff]
    %v73 = vld [vmem:[#allocation5 + $0x38] sm:$0xff]
    %v74 = vld [vmem:[#allocation5 + $0x40] sm:$0xff]
    %v75 = vld [vmem:[#allocation5 + $0x48] sm:$0xff]
    %v76 = vld [vmem:[#allocation5 + $0x50] sm:$0xff]
    %v77 = vld [vmem:[#allocation5 + $0x58] sm:$0xff]
    %v78 = vld [vmem:[#allocation5 + $0x60] sm:$0xff]
    %v79 = vld [vmem:[#allocation5 + $0x68] sm:$0xff]
    %v80 = vld [vmem:[#allocation5 + $0x70] sm:$0xff]
    %v81 = vld [vmem:[#allocation5 + $0x78] sm:$0xff]
    %v82 = vld [vmem:[%s2] sm:$0x1]
    %v84 = vlaneseq
    %v85 = vshrl.u32 %v84, 7
    %v86 = vsub.s32 0, %v85
    %v87 = vrot.slane %v82, %v86
    %89 = vmatprep.subr.mxu0 0.0
    %90 = vmatpush1.msra.mxu0 %v81
    %91 = vmatprep.subr.mxu0 0.0
    %92 = vmatpush1.msra.mxu0 %v80
    %93 = vmatprep.subr.mxu0 0.0
    %94 = vmatpush1.msra.mxu0 %v79
    %95 = vmatprep.subr.mxu0 0.0
    %96 = vmatpush1.msra.mxu0 %v78
    %97 = vmatprep.subr.mxu0 0.0
    %98 = vmatpush1.msra.mxu0 %v77
    %99 = vmatprep.subr.mxu0 0.0
    %100 = vmatpush1.msra.mxu0 %v76
    %101 = vmatprep.subr.mxu0 0.0
    %102 = vmatpush1.msra.mxu0 %v75
    %103 = vmatprep.subr.mxu0 0.0
    %104 = vmatpush1.msra.mxu0 %v74
    %105 = vmatprep.subr.mxu0 0.0
    %106 = vmatpush1.msra.mxu0 %v73
    %107 = vmatprep.subr.mxu0 0.0
    %108 = vmatpush1.msra.mxu0 %v72
    %109 = vmatprep.subr.mxu0 0.0
    %110 = vmatpush1.msra.mxu0 %v71
    %111 = vmatprep.subr.mxu0 0.0
    %112 = vmatpush1.msra.mxu0 %v70
    %113 = vmatprep.subr.mxu0 0.0
    %114 = vmatpush1.msra.mxu0 %v69
    %115 = vmatprep.subr.mxu0 0.0
    %116 = vmatpush1.msra.mxu0 %v68
    %117 = vmatprep.subr.mxu0 0.0
    %118 = vmatpush1.msra.mxu0 %v67
    %119 = vmatprep.subr.mxu0 0.0
    %120 = vmatpush1.msra.mxu0 %v66
    %121 = vmatprep.subr.mxu0 0.0
    %122 = vmatpush2.msra.mxu0 0.0
    %123 = vmatprep.subr.mxu0 0.0
    %124 = vmatpush2.msra.mxu0 0.0
    %125 = vmatprep.subr.mxu0 0.0
    %126 = vmatpush2.msra.mxu0 0.0
    %127 = vmatprep.subr.mxu0 0.0
    %128 = vmatpush2.msra.mxu0 0.0
    %129 = vmatprep.subr.mxu0 0.0
    %130 = vmatpush2.msra.mxu0 0.0
    %131 = vmatprep.subr.mxu0 0.0
    %132 = vmatpush2.msra.mxu0 0.0
    %133 = vmatprep.subr.mxu0 0.0
    %134 = vmatpush2.msra.mxu0 0.0
    %135 = vmatprep.subr.mxu0 0.0
    %136 = vmatpush2.msra.mxu0 0.0
    %137 = vmatprep.subr.mxu0 0.0
    %138 = vmatpush2.msra.mxu0 0.0
    %139 = vmatprep.subr.mxu0 0.0
    %140 = vmatpush2.msra.mxu0 0.0
    %141 = vmatprep.subr.mxu0 0.0
    %142 = vmatpush2.msra.mxu0 0.0
    %143 = vmatprep.subr.mxu0 0.0
    %144 = vmatpush2.msra.mxu0 0.0
    %145 = vmatprep.subr.mxu0 0.0
    %146 = vmatpush2.msra.mxu0 0.0
    %147 = vmatprep.subr.mxu0 0.0
    %148 = vmatpush2.msra.mxu0 0.0
    %149 = vmatprep.subr.mxu0 0.0
    %150 = vmatpush2.msra.mxu0 0.0
    %151 = vmatprep.subr.mxu0 0.0
    %152 = vmatpush2.msra.mxu0 0.0
    %153 = vmatprep.mubr.f32.mxu0 0.0
    %154 = vmatmul.mubr.f32.gmra.mxu0 %v62
    %v155 = vpop.f32.mrf.mxu0
    %v156 = vadd.f32 %v87, %v155
    %v157 = vpop.f32.mrf.mxu0
    %158 = vmatprep.mubr.f32.mxu0 0.0
    %159 = vmatmul.mubr.f32.gmra.mxu0 %v63
    %v160 = vpop.f32.mrf.mxu0
    %v161 = vadd.f32 %v87, %v160
    %v162 = vpop.f32.mrf.mxu0
    %163 = vmatprep.mubr.f32.mxu0 0.0
    %164 = vmatmul.mubr.f32.gmra.mxu0 %v64
    %v165 = vpop.f32.mrf.mxu0
    %v166 = vadd.f32 %v87, %v165
    %v167 = vpop.f32.mrf.mxu0
    %168 = vmatprep.mubr.f32.mxu0 0.0
    %169 = vmatmul.mubr.f32.gmra.mxu0 %v65
    %v170 = vpop.f32.mrf.mxu0
    %v171 = vadd.f32 %v87, %v170
    %v172 = vpop.f32.mrf.mxu0
    %173 = vdwg.mxu0
    %v174 = vmax.f32 %v156, 0.0
    %v175 = vmax.f32 %v161, 0.0
    %v176 = vmax.f32 %v166, 0.0
    %v177 = vmax.f32 %v171, 0.0
    %v178 = vld [vmem:[#allocation7] sm:$0xff]
    %v179 = vld [vmem:[#allocation7 + $0x8] sm:$0xff]
    %v180 = vld [vmem:[#allocation7 + $0x10] sm:$0xff]
    %v181 = vld [vmem:[#allocation7 + $0x18] sm:$0xff]
    %v182 = vld [vmem:[#allocation7 + $0x20] sm:$0xff]
    %v183 = vld [vmem:[#allocation7 + $0x28] sm:$0xff]
    %v184 = vld [vmem:[#allocation7 + $0x30] sm:$0xff]
    %v185 = vld [vmem:[#allocation7 + $0x38] sm:$0xff]
    %v186 = vld [vmem:[#allocation7 + $0x40] sm:$0xff]
    %v187 = vld [vmem:[#allocation7 + $0x48] sm:$0xff]
    %v188 = vld [vmem:[#allocation7 + $0x50] sm:$0xff]
    %v189 = vld [vmem:[#allocation7 + $0x58] sm:$0xff]
    %v190 = vld [vmem:[#allocation7 + $0x60] sm:$0xff]
    %v191 = vld [vmem:[#allocation7 + $0x68] sm:$0xff]
    %v192 = vld [vmem:[#allocation7 + $0x70] sm:$0xff]
    %v193 = vld [vmem:[#allocation7 + $0x78] sm:$0xff]
    %v194 = vld [vmem:[%s4] sm:$0x1]
    %v196 = vlaneseq
    %v197 = vshrl.u32 %v196, 7
    %v198 = vsub.s32 0, %v197
    %v199 = vrot.slane %v194, %v198
    %201 = vmatprep.subr.mxu0 0.0
    %202 = vmatpush1.msra.mxu0 %v193
    %203 = vmatprep.subr.mxu0 0.0
    %204 = vmatpush1.msra.mxu0 %v192
    %205 = vmatprep.subr.mxu0 0.0
    %206 = vmatpush1.msra.mxu0 %v191
    %207 = vmatprep.subr.mxu0 0.0
    %208 = vmatpush1.msra.mxu0 %v190
    %209 = vmatprep.subr.mxu0 0.0
    %210 = vmatpush1.msra.mxu0 %v189
    %211 = vmatprep.subr.mxu0 0.0
    %212 = vmatpush1.msra.mxu0 %v188
    %213 = vmatprep.subr.mxu0 0.0
    %214 = vmatpush1.msra.mxu0 %v187
    %215 = vmatprep.subr.mxu0 0.0
    %216 = vmatpush1.msra.mxu0 %v186
    %217 = vmatprep.subr.mxu0 0.0
    %218 = vmatpush1.msra.mxu0 %v185
    %219 = vmatprep.subr.mxu0 0.0
    %220 = vmatpush1.msra.mxu0 %v184
    %221 = vmatprep.subr.mxu0 0.0
    %222 = vmatpush1.msra.mxu0 %v183
    %223 = vmatprep.subr.mxu0 0.0
    %224 = vmatpush1.msra.mxu0 %v182
    %225 = vmatprep.subr.mxu0 0.0
    %226 = vmatpush1.msra.mxu0 %v181
    %227 = vmatprep.subr.mxu0 0.0
    %228 = vmatpush1.msra.mxu0 %v180
    %229 = vmatprep.subr.mxu0 0.0
    %230 = vmatpush1.msra.mxu0 %v179
    %231 = vmatprep.subr.mxu0 0.0
    %232 = vmatpush1.msra.mxu0 %v178
    %233 = vmatprep.subr.mxu0 0.0
    %234 = vmatpush2.msra.mxu0 0.0
    %235 = vmatprep.subr.mxu0 0.0
    %236 = vmatpush2.msra.mxu0 0.0
    %237 = vmatprep.subr.mxu0 0.0
    %238 = vmatpush2.msra.mxu0 0.0
    %239 = vmatprep.subr.mxu0 0.0
    %240 = vmatpush2.msra.mxu0 0.0
    %241 = vmatprep.subr.mxu0 0.0
    %242 = vmatpush2.msra.mxu0 0.0
    %243 = vmatprep.subr.mxu0 0.0
    %244 = vmatpush2.msra.mxu0 0.0
    %245 = vmatprep.subr.mxu0 0.0
    %246 = vmatpush2.msra.mxu0 0.0
    %247 = vmatprep.subr.mxu0 0.0
    %248 = vmatpush2.msra.mxu0 0.0
    %249 = vmatprep.subr.mxu0 0.0
    %250 = vmatpush2.msra.mxu0 0.0
    %251 = vmatprep.subr.mxu0 0.0
    %252 = vmatpush2.msra.mxu0 0.0
    %253 = vmatprep.subr.mxu0 0.0
    %254 = vmatpush2.msra.mxu0 0.0
    %255 = vmatprep.subr.mxu0 0.0
    %256 = vmatpush2.msra.mxu0 0.0
    %257 = vmatprep.subr.mxu0 0.0
    %258 = vmatpush2.msra.mxu0 0.0
    %259 = vmatprep.subr.mxu0 0.0
    %260 = vmatpush2.msra.mxu0 0.0
    %261 = vmatprep.subr.mxu0 0.0
    %262 = vmatpush2.msra.mxu0 0.0
    %263 = vmatprep.subr.mxu0 0.0
    %264 = vmatpush2.msra.mxu0 0.0
    %265 = vmatprep.mubr.f32.mxu0 0.0
    %266 = vmatmul.mubr.f32.gmra.mxu0 %v174
    %v267 = vpop.f32.mrf.mxu0
    %v268 = vadd.f32 %v199, %v267
    %v269 = vpop.f32.mrf.mxu0
    %270 = vmatprep.mubr.f32.mxu0 0.0
    %271 = vmatmul.mubr.f32.gmra.mxu0 %v175
    %v272 = vpop.f32.mrf.mxu0
    %v273 = vadd.f32 %v199, %v272
    %v274 = vpop.f32.mrf.mxu0
    %275 = vmatprep.mubr.f32.mxu0 0.0
    %276 = vmatmul.mubr.f32.gmra.mxu0 %v176
    %v277 = vpop.f32.mrf.mxu0
    %v278 = vadd.f32 %v199, %v277
    %v279 = vpop.f32.mrf.mxu0
    %280 = vmatprep.mubr.f32.mxu0 0.0
    %281 = vmatmul.mubr.f32.gmra.mxu0 %v177
    %v282 = vpop.f32.mrf.mxu0
    %v283 = vadd.f32 %v199, %v282
    %v284 = vpop.f32.mrf.mxu0
    %285 = vdwg.mxu0
    %286 = vst [vmem:[#allocation8] sm:$0xff] %v268
    %287 = vst [vmem:[#allocation8 + $0x8] sm:$0xff] %v273
    %288 = vst [vmem:[#allocation8 + $0x10] sm:$0xff] %v278
    %289 = vst [vmem:[#allocation8 + $0x18] sm:$0xff] %v283
    // Predicated region
    $region34: #{tpu_custom_call.1} parent=1 // pred_check
      _
    $region35: #{tpu_custom_call.1} parent=1 // pred_check_branch
      %291 = sbr.rel (0) target = $region37
    $region36: #{tpu_custom_call.1} parent=1 // pred_region
      %s293 = ssub.s32 512, 512
      %294 = vsyncadd [#allocation4], %s293
      %s295 = sshll.u32 [#allocation8], 4
      %s296 = int_to_ptr.vmem [resolvable:$true] %s295
      %301 = dma.vmem_to_hbm [thread:$0]  %s296, 512, %s5, [#allocation4], 128, 128, 8
    $region37: #{tpu_custom_call.1} parent=1 // pred_fallthru
      _
    // Predicated region
    $region38: #{tpu_custom_call.1} parent=1 // pred_check
      _
    $region39: #{tpu_custom_call.1} parent=1 // pred_check_branch
      %303 = sbr.rel (0) target = $region41
    $region40: #{tpu_custom_call.1} parent=1 // pred_region
      %304 = dma.done [#allocation4], 512
    $region41: #{tpu_custom_call.1} parent=1 // pred_fallthru
      _
    %305 = vsyncpa [#allocation3], 1
    %306 = vsyncpa [#allocation6], 1
    %307 = vsyncpa [#allocation4], 1

</llo_original>
